<compile_context>
chip_gen: v7x
topology: tpu7x:2x2x1
jax: 0.10.0
libtpu: 0.0.40
codegen_flags: <defaults>
</compile_context>

<pallas_src>
import numpy as np
import jax
import jax.numpy as jnp
from jax.experimental import pallas as pl
from jax.experimental.pallas import tpu as pltpu


_IN = 28 * 28      # 784: streamed at full extent (no lane pad on x)
_HID_PAD = 128     # 64  -> 128 lanes (zero-padded, semantics-preserving)
_OUT_PAD = 128     # 10  -> 128 lanes (keep lane-dense output: unmasked vst)


def _ffnet_kernel(x_ref, w1_ref, b1_ref, w2_ref, b2_ref, w3_ref, b3_ref, o_ref):
    def fflayer(h, w_ref, b_ref):
        # Row-wise L2 norm in f32, matching torch x.norm(2, 1).
        norm = jnp.sqrt(jnp.sum(h * h, axis=1, keepdims=True))
        # EUP vrcp co-issues in its own slot; ~1e-4..1e-3 relative error.
        inv = pl.reciprocal(norm + 0.0001, approx=True)
        # bf16 operands, f32 accumulation on the MXU.
        h_dir = (h * inv).astype(jnp.bfloat16)
        z = jnp.dot(h_dir, w_ref[...], preferred_element_type=jnp.float32)
        z = z + b_ref[...]                      # bias (1, out) f32, broadcasts
        return jnp.maximum(z, 0.0)              # ReLU

    h = x_ref[...]
    h = fflayer(h, w1_ref, b1_ref)
    h = fflayer(h, w2_ref, b2_ref)
    h = fflayer(h, w3_ref, b3_ref)
    o_ref[...] = h


def _round_up(n, m):
    return ((n + m - 1) // m) * m


def _pad_wb(w, b, k_pad, n_pad):
    """PyTorch (out, in) weight -> bf16 zero-padded (k_pad, n_pad); bias -> f32 (1, n_pad)."""
    wt = jnp.asarray(w, jnp.float32).T
    wt = jnp.pad(wt, ((0, k_pad - wt.shape[0]), (0, n_pad - wt.shape[1])))
    br = jnp.pad(jnp.asarray(b, jnp.float32), (0, n_pad - b.shape[0])).reshape(1, n_pad)
    return wt.astype(jnp.bfloat16), br


def ffnet_forward(x_nchw, params, *, tb=1024):
    """x_nchw: (B, 1, 28, 28) float32.  Returns (B, 10) float32."""
    B = x_nchw.shape[0]
    x = x_nchw.reshape(B, -1).astype(jnp.float32)            # (B, 784), like x.view(B, -1)

    (w1, b1), (w2, b2), (w3, b3) = params
    w1t, b1r = _pad_wb(w1, b1, _IN, _HID_PAD)                 # K stays 784 (no pad)
    w2t, b2r = _pad_wb(w2, b2, _HID_PAD, _HID_PAD)
    w3t, b3r = _pad_wb(w3, b3, _HID_PAD, _OUT_PAD)

    # Only sublane-align the batch (<= 7 zero rows); zero rows are safe because
    # of the +1e-4 in the norm denominator and per-row independence.
    B_pad = _round_up(B, 8)
    if B_pad != B:
        x = jnp.pad(x, ((0, B_pad - B), (0, 0)))

    # Batch tile: multiple of 8; guarantee >= 2 grid steps when possible so the
    # "parallel" grid axis shards across v7x's two TensorCores.
    tb = _round_up(max(tb, 8), 8)
    TB = min(tb, B_pad)
    if B_pad >= 16 and B_pad <= TB:
        TB = _round_up((B_pad + 1) // 2, 8)
    grid = (pl.cdiv(B_pad, TB),)
    # A ragged last block (B_pad % TB != 0) is safe: OOB rows read garbage that
    # never mixes with real rows, and OOB stores are dropped.

    w_bytes = 2 * (_IN * _HID_PAD + _HID_PAD * _HID_PAD + _HID_PAD * _OUT_PAD)
    flops = 2 * B_pad * (_IN * _HID_PAD + _HID_PAD * _HID_PAD + _HID_PAD * _OUT_PAD)
    bytes_accessed = (4 * B_pad * (_IN + _OUT_PAD)            # x read + out write (f32)
                      + w_bytes                               # bf16 weights
                      + 4 * (2 * _HID_PAD + _OUT_PAD))        # f32 biases
    transcendentals = 3 * 2 * B_pad                           # sqrt + rcp per layer per row

    def const2d(shape):
        # Constant index_map -> block never changes -> stays VMEM-resident,
        # no per-step re-DMA (single-buffering confirmed adequate; Buffered(1)
        # would only trim ~0.3 MiB of redundant second buffer).
        return pl.BlockSpec(shape, lambda i: (0, 0))

    out = pl.pallas_call(
        _ffnet_kernel,
        out_shape=jax.ShapeDtypeStruct((B_pad, _OUT_PAD), jnp.float32),
        grid=grid,
        in_specs=[
            pl.BlockSpec((TB, _IN), lambda i: (i, 0)),               # x: batch-tiled stream
            const2d((_IN, _HID_PAD)), const2d((1, _HID_PAD)),        # fc1 (resident)
            const2d((_HID_PAD, _HID_PAD)), const2d((1, _HID_PAD)),   # fc2 (resident)
            const2d((_HID_PAD, _OUT_PAD)), const2d((1, _OUT_PAD)),   # fc3 (resident)
        ],
        out_specs=pl.BlockSpec((TB, _OUT_PAD), lambda i: (i, 0)),    # lane-dense store
        compiler_params=pltpu.CompilerParams(
            dimension_semantics=("parallel",),          # megacore shard on v7x
            vmem_limit_bytes=32 * 1024 * 1024,          # covers TB up to ~2048 on v5e too
        ),
        cost_estimate=pl.CostEstimate(
            flops=flops,
            transcendentals=transcendentals,
            bytes_accessed=bytes_accessed,
        ),
    )(x, w1t, b1r, w2t, b2r, w3t, b3r)

    return out[:B, :10]


def _init_linear(key, in_features, out_features):
    # Deterministic stand-in for torch.nn.Linear default init:
    # U(-1/sqrt(in), 1/sqrt(in)) for weight and bias.
    kw, kb = jax.random.split(key)
    bound = 1.0 / np.sqrt(in_features)
    w = jax.random.uniform(kw, (out_features, in_features), jnp.float32, -bound, bound)
    b = jax.random.uniform(kb, (out_features,), jnp.float32, -bound, bound)
    return w, b


def _reference_forward(x_nchw, params):
    # Pure-JAX f32 reference of the module's forward semantics.
    h = x_nchw.reshape(x_nchw.shape[0], -1).astype(jnp.float32)
    for w, b in params:
        norm = jnp.sqrt(jnp.sum(h * h, axis=1, keepdims=True))
        h = h / (norm + 0.0001)
        h = jnp.maximum(h @ w.T + b[None, :], 0.0)
    return h


if __name__ == "__main__":
    key = jax.random.PRNGKey(0)
    k_in, k1, k2, k3 = jax.random.split(key, 4)

    B = 4
    x = jax.random.normal(k_in, (B, 1, 28, 28), jnp.float32)   # NCHW MNIST-like input

    params = (
        _init_linear(k1, 28 * 28, 64),   # fc1
        _init_linear(k2, 64, 64),        # fc2
        _init_linear(k3, 64, 10),        # fc3
    )

    out = jax.block_until_ready(ffnet_forward(x, params))
    ref = jax.block_until_ready(_reference_forward(x, params))
    assert out.shape == (B, 10)
    # bf16 matmul operands + approx (EUP) reciprocal vs the pure-f32 reference:
    # relaxed but still meaningful tolerance.
    np.testing.assert_allclose(np.asarray(out), np.asarray(ref), rtol=2e-2, atol=5e-3)

    print("KERNEL_OK")
</pallas_src>

<mosaic_0001>
module attributes {stable_mosaic.version = 11 : i64} {
  func.func @_ffnet_kernel(%arg0: i32, %arg1: memref<8x784xf32, #tpu.memory_space<vmem>>, %arg2: memref<784x128xbf16, #tpu.memory_space<vmem>>, %arg3: memref<1x128xf32, #tpu.memory_space<vmem>>, %arg4: memref<128x128xbf16, #tpu.memory_space<vmem>>, %arg5: memref<1x128xf32, #tpu.memory_space<vmem>>, %arg6: memref<128x128xbf16, #tpu.memory_space<vmem>>, %arg7: memref<1x128xf32, #tpu.memory_space<vmem>>, %arg8: memref<8x128xf32, #tpu.memory_space<vmem>>) attributes {dimension_semantics = [#tpu.dimension_semantics<parallel>], iteration_bounds = array<i64: 1>, scalar_prefetch = 0 : i64, scratch_operands = 0 : i64, tpu.core_type = #tpu.core_type<tc>, window_params = [{transform_indices = @transform_0, window_bounds = array<i64: 8, 784>}, {pipeline_mode = #tpu.pipeline_mode<synchronous>, transform_indices = @transform_1, window_bounds = array<i64: 784, 128>}, {pipeline_mode = #tpu.pipeline_mode<synchronous>, transform_indices = @transform_2, window_bounds = array<i64: 1, 128>}, {pipeline_mode = #tpu.pipeline_mode<synchronous>, transform_indices = @transform_3, window_bounds = array<i64: 128, 128>}, {pipeline_mode = #tpu.pipeline_mode<synchronous>, transform_indices = @transform_4, window_bounds = array<i64: 1, 128>}, {pipeline_mode = #tpu.pipeline_mode<synchronous>, transform_indices = @transform_5, window_bounds = array<i64: 128, 128>}, {pipeline_mode = #tpu.pipeline_mode<synchronous>, transform_indices = @transform_6, window_bounds = array<i64: 1, 128>}, {transform_indices = @transform_7, window_bounds = array<i64: 8, 128>}]} {
    %c0 = arith.constant 0 : index
    %c0_0 = arith.constant 0 : index
    %0 = vector.load %arg1[%c0, %c0_0] : memref<8x784xf32, #tpu.memory_space<vmem>>, vector<8x784xf32>
    %1 = arith.mulf %0, %0 : vector<8x784xf32>
    %cst = arith.constant dense<0.000000e+00> : vector<8xf32>
    %2 = vector.multi_reduction <add>, %1, %cst [1] : vector<8x784xf32> to vector<8xf32>
    %3 = vector.shape_cast %2 : vector<8xf32> to vector<8x1xf32>
    %4 = math.sqrt %3 : vector<8x1xf32>
    %cst_1 = arith.constant 9.99999974E-5 : f32
    %5 = vector.broadcast %cst_1 : f32 to vector<8x1xf32>
    %6 = arith.addf %4, %5 : vector<8x1xf32>
    %7 = tpu.reciprocal %6 {approx = true} : vector<8x1xf32> -> vector<8x1xf32>
    %8 = vector.broadcast %7 : vector<8x1xf32> to vector<8x784xf32>
    %9 = arith.mulf %0, %8 : vector<8x784xf32>
    %10 = arith.truncf %9 : vector<8x784xf32> to vector<8x784xbf16>
    %c0_2 = arith.constant 0 : index
    %c0_3 = arith.constant 0 : index
    %11 = vector.load %arg2[%c0_2, %c0_3] : memref<784x128xbf16, #tpu.memory_space<vmem>>, vector<784x128xbf16>
    %cst_4 = arith.constant dense<0.000000e+00> : vector<8x128xf32>
    %12 = tpu.matmul %10, %11, %cst_4 {dimension_numbers = #tpu.dot_dimension_numbers<[1], [0], [0], [1], [0, 0, 1, 1], [], []>} : vector<8x784xbf16>, vector<784x128xbf16>, vector<8x128xf32> -> vector<8x128xf32>
    %c0_5 = arith.constant 0 : index
    %c0_6 = arith.constant 0 : index
    %13 = vector.load %arg3[%c0_5, %c0_6] : memref<1x128xf32, #tpu.memory_space<vmem>>, vector<1x128xf32>
    %14 = vector.broadcast %13 : vector<1x128xf32> to vector<8x128xf32>
    %15 = arith.addf %12, %14 : vector<8x128xf32>
    %cst_7 = arith.constant 0.000000e+00 : f32
    %16 = vector.broadcast %cst_7 : f32 to vector<8x128xf32>
    %17 = arith.maximumf %15, %16 : vector<8x128xf32>
    %18 = arith.mulf %17, %17 : vector<8x128xf32>
    %cst_8 = arith.constant dense<0.000000e+00> : vector<8xf32>
    %19 = vector.multi_reduction <add>, %18, %cst_8 [1] : vector<8x128xf32> to vector<8xf32>
    %20 = vector.shape_cast %19 : vector<8xf32> to vector<8x1xf32>
    %21 = math.sqrt %20 : vector<8x1xf32>
    %cst_9 = arith.constant 9.99999974E-5 : f32
    %22 = vector.broadcast %cst_9 : f32 to vector<8x1xf32>
    %23 = arith.addf %21, %22 : vector<8x1xf32>
    %24 = tpu.reciprocal %23 {approx = true} : vector<8x1xf32> -> vector<8x1xf32>
    %25 = vector.broadcast %24 : vector<8x1xf32> to vector<8x128xf32>
    %26 = arith.mulf %17, %25 : vector<8x128xf32>
    %27 = arith.truncf %26 : vector<8x128xf32> to vector<8x128xbf16>
    %c0_10 = arith.constant 0 : index
    %c0_11 = arith.constant 0 : index
    %28 = vector.load %arg4[%c0_10, %c0_11] : memref<128x128xbf16, #tpu.memory_space<vmem>>, vector<128x128xbf16>
    %cst_12 = arith.constant dense<0.000000e+00> : vector<8x128xf32>
    %29 = tpu.matmul %27, %28, %cst_12 {dimension_numbers = #tpu.dot_dimension_numbers<[1], [0], [0], [1], [0, 0, 1, 1], [], []>} : vector<8x128xbf16>, vector<128x128xbf16>, vector<8x128xf32> -> vector<8x128xf32>
    %c0_13 = arith.constant 0 : index
    %c0_14 = arith.constant 0 : index
    %30 = vector.load %arg5[%c0_13, %c0_14] : memref<1x128xf32, #tpu.memory_space<vmem>>, vector<1x128xf32>
    %31 = vector.broadcast %30 : vector<1x128xf32> to vector<8x128xf32>
    %32 = arith.addf %29, %31 : vector<8x128xf32>
    %cst_15 = arith.constant 0.000000e+00 : f32
    %33 = vector.broadcast %cst_15 : f32 to vector<8x128xf32>
    %34 = arith.maximumf %32, %33 : vector<8x128xf32>
    %35 = arith.mulf %34, %34 : vector<8x128xf32>
    %cst_16 = arith.constant dense<0.000000e+00> : vector<8xf32>
    %36 = vector.multi_reduction <add>, %35, %cst_16 [1] : vector<8x128xf32> to vector<8xf32>
    %37 = vector.shape_cast %36 : vector<8xf32> to vector<8x1xf32>
    %38 = math.sqrt %37 : vector<8x1xf32>
    %cst_17 = arith.constant 9.99999974E-5 : f32
    %39 = vector.broadcast %cst_17 : f32 to vector<8x1xf32>
    %40 = arith.addf %38, %39 : vector<8x1xf32>
    %41 = tpu.reciprocal %40 {approx = true} : vector<8x1xf32> -> vector<8x1xf32>
    %42 = vector.broadcast %41 : vector<8x1xf32> to vector<8x128xf32>
    %43 = arith.mulf %34, %42 : vector<8x128xf32>
    %44 = arith.truncf %43 : vector<8x128xf32> to vector<8x128xbf16>
    %c0_18 = arith.constant 0 : index
    %c0_19 = arith.constant 0 : index
    %45 = vector.load %arg6[%c0_18, %c0_19] : memref<128x128xbf16, #tpu.memory_space<vmem>>, vector<128x128xbf16>
    %cst_20 = arith.constant dense<0.000000e+00> : vector<8x128xf32>
    %46 = tpu.matmul %44, %45, %cst_20 {dimension_numbers = #tpu.dot_dimension_numbers<[1], [0], [0], [1], [0, 0, 1, 1], [], []>} : vector<8x128xbf16>, vector<128x128xbf16>, vector<8x128xf32> -> vector<8x128xf32>
    %c0_21 = arith.constant 0 : index
    %c0_22 = arith.constant 0 : index
    %47 = vector.load %arg7[%c0_21, %c0_22] : memref<1x128xf32, #tpu.memory_space<vmem>>, vector<1x128xf32>
    %48 = vector.broadcast %47 : vector<1x128xf32> to vector<8x128xf32>
    %49 = arith.addf %46, %48 : vector<8x128xf32>
    %cst_23 = arith.constant 0.000000e+00 : f32
    %50 = vector.broadcast %cst_23 : f32 to vector<8x128xf32>
    %51 = arith.maximumf %49, %50 : vector<8x128xf32>
    %c0_24 = arith.constant 0 : index
    %c0_25 = arith.constant 0 : index
    %52 = vector.load %arg8[%c0_24, %c0_25] : memref<8x128xf32, #tpu.memory_space<vmem>>, vector<8x128xf32>
    tpu.vector_store %arg8[%c0_24, %c0_25], %51 {strides = array<i32>} : memref<8x128xf32, #tpu.memory_space<vmem>>, vector<8x128xf32>,
    return
  }
  func.func @transform_0(%arg0: i32) -> (i32, i32) {
    %c0_i32 = arith.constant 0 : i32
    %c0_i32_0 = arith.constant 0 : i32
    return %arg0, %c0_i32 : i32, i32
  }
  func.func @transform_1(%arg0: i32) -> (i32, i32) {
    %c0_i32 = arith.constant 0 : i32
    %c0_i32_0 = arith.constant 0 : i32
    %c0_i32_1 = arith.constant 0 : i32
    return %c0_i32, %c0_i32_0 : i32, i32
  }
  func.func @transform_2(%arg0: i32) -> (i32, i32) {
    %c0_i32 = arith.constant 0 : i32
    %c0_i32_0 = arith.constant 0 : i32
    %c0_i32_1 = arith.constant 0 : i32
    return %c0_i32, %c0_i32_0 : i32, i32
  }
  func.func @transform_3(%arg0: i32) -> (i32, i32) {
    %c0_i32 = arith.constant 0 : i32
    %c0_i32_0 = arith.constant 0 : i32
    %c0_i32_1 = arith.constant 0 : i32
    return %c0_i32, %c0_i32_0 : i32, i32
  }
  func.func @transform_4(%arg0: i32) -> (i32, i32) {
    %c0_i32 = arith.constant 0 : i32
    %c0_i32_0 = arith.constant 0 : i32
    %c0_i32_1 = arith.constant 0 : i32
    return %c0_i32, %c0_i32_0 : i32, i32
  }
  func.func @transform_5(%arg0: i32) -> (i32, i32) {
    %c0_i32 = arith.constant 0 : i32
    %c0_i32_0 = arith.constant 0 : i32
    %c0_i32_1 = arith.constant 0 : i32
    return %c0_i32, %c0_i32_0 : i32, i32
  }
  func.func @transform_6(%arg0: i32) -> (i32, i32) {
    %c0_i32 = arith.constant 0 : i32
    %c0_i32_0 = arith.constant 0 : i32
    %c0_i32_1 = arith.constant 0 : i32
    return %c0_i32, %c0_i32_0 : i32, i32
  }
  func.func @transform_7(%arg0: i32) -> (i32, i32) {
    %c0_i32 = arith.constant 0 : i32
    %c0_i32_0 = arith.constant 0 : i32
    return %arg0, %c0_i32 : i32, i32
  }
}

</mosaic_0001>

<llo_original>
// kernel: tpu_custom_call.1
$region0: #{tpu_custom_call.1}
  #allocation0 [shape = 'u32[]', space=smem, size = 0x4, offset = 0x4, fixed_abs, tag = 'smem constant byte address 0x4 - core index']
  #allocation1 [shape = 'u32[144,128]{1,0:T(1,128)}', space=vmem, size = 0x12000, scoped, tag = 'internal scratch']
  %s0 = inlined_call_operand.hbm [shape: f32[8,784], index: 0, kind: input, shape index: {}]
  %s1 = inlined_call_operand.hbm [shape: bf16[784,128], index: 1, kind: input, shape index: {}]
  %s2 = inlined_call_operand.vmem [shape: f32[1,128], index: 2, kind: input, shape index: {}]
  %s3 = inlined_call_operand.hbm [shape: bf16[128,128], index: 3, kind: input, shape index: {}]
  %s4 = inlined_call_operand.vmem [shape: f32[1,128], index: 4, kind: input, shape index: {}]
  %s5 = inlined_call_operand.hbm [shape: bf16[128,128], index: 5, kind: input, shape index: {}]
  %s6 = inlined_call_operand.vmem [shape: f32[1,128], index: 6, kind: input, shape index: {}]
  %s7 = inlined_call_operand.hbm [shape: f32[8,128], index: 7, kind: output, shape index: {}]
  %s8 = sld [smem:[#allocation0]]
  $region54: #{tpu_custom_call.1} parent=0
    _
  %s10 = ssub.s32 1, %s8
  %s11 = scalar_select 0, %s10, %s8
  $region1: #{tpu_custom_call.1} parent=0
    #allocation2 [shape = 'u8[28672]{0}', space=vmem, size = 0x7000, scoped, tag = 'input window, operand 0, single buffered']
    #allocation3 [shape = 's32[1]{0}', space=sflag, size = 0x4, scoped, tag = 'scoped memory for tpu_custom_call.1']
    #allocation4 [shape = 's32[1]{0}', space=sflag, size = 0x4, scoped, tag = 'scoped memory for tpu_custom_call.1']
    #allocation5 [shape = 'u8[200704]{0}', space=vmem, size = 0x31000, scoped, tag = 'input window, operand 1, single buffered']
    #allocation6 [shape = 's32[1]{0}', space=sflag, size = 0x4, scoped, tag = 'scoped memory for tpu_custom_call.1']
    #allocation7 [shape = 'u8[32768]{0}', space=vmem, size = 0x8000, scoped, tag = 'input window, operand 3, single buffered']
    #allocation8 [shape = 'u8[32768]{0}', space=vmem, size = 0x8000, scoped, tag = 'input window, operand 5, single buffered']
    #allocation9 [shape = 's32[1]{0}', space=sflag, size = 0x4, scoped, tag = 'scoped memory for tpu_custom_call.1']
    #allocation10 [shape = 'u8[4096]{0}', space=vmem, size = 0x1000, scoped, tag = 'output window, operand 0, single buffered']
    %12 = vsyncpa [#allocation3], 0
    %13 = vsyncpa [#allocation6], 0
    %14 = vsyncpa [#allocation9], 0
    %15 = vsyncpa [#allocation4], 0
    // Predicated region
    $region2: #{tpu_custom_call.1} parent=1 // pred_check
      _
    $region3: #{tpu_custom_call.1} parent=1 // pred_check_branch
      %17 = sbr.rel (0) target = $region5
    $region4: #{tpu_custom_call.1} parent=1 // pred_region
      %s19 = ssub.s32 896, 896
      %20 = vsyncadd [#allocation3], %s19
      %s22 = sshll.u32 [#allocation2], 4
      %s23 = int_to_ptr.vmem [resolvable:$true] %s22
      %25 = dma.hbm_to_vmem [thread:$0]  %s0, 896, %s23, [#allocation3]
    $region5: #{tpu_custom_call.1} parent=1 // pred_fallthru
      _
    // Predicated region
    $region6: #{tpu_custom_call.1} parent=1 // pred_check
      _
    $region7: #{tpu_custom_call.1} parent=1 // pred_check_branch
      %27 = sbr.rel (0) target = $region9
    $region8: #{tpu_custom_call.1} parent=1 // pred_region
      %s29 = ssub.s32 6272, 6272
      %30 = vsyncadd [#allocation6], %s29
      %s31 = sshll.u32 [#allocation5], 4
      %s32 = int_to_ptr.vmem [resolvable:$true] %s31
      %37 = dma.hbm_to_vmem [thread:$0]  %s1, 6272, %s32, [#allocation6], 64, 64, 4
    $region9: #{tpu_custom_call.1} parent=1 // pred_fallthru
      _
    // Predicated region
    $region10: #{tpu_custom_call.1} parent=1 // pred_check
      _
    $region11: #{tpu_custom_call.1} parent=1 // pred_check_branch
      %39 = sbr.rel (0) target = $region13
    $region12: #{tpu_custom_call.1} parent=1 // pred_region
      _
    $region13: #{tpu_custom_call.1} parent=1 // pred_fallthru
      _
    // Predicated region
    $region14: #{tpu_custom_call.1} parent=1 // pred_check
      _
    $region15: #{tpu_custom_call.1} parent=1 // pred_check_branch
      %41 = sbr.rel (0) target = $region17
    $region16: #{tpu_custom_call.1} parent=1 // pred_region
      %s43 = ssub.s32 1024, 1024
      %44 = vsyncadd [#allocation6], %s43
      %s45 = sshll.u32 [#allocation7], 4
      %s46 = int_to_ptr.vmem [resolvable:$true] %s45
      %51 = dma.hbm_to_vmem [thread:$0]  %s3, 1024, %s46, [#allocation6], 64, 64, 4
    $region17: #{tpu_custom_call.1} parent=1 // pred_fallthru
      _
    // Predicated region
    $region18: #{tpu_custom_call.1} parent=1 // pred_check
      _
    $region19: #{tpu_custom_call.1} parent=1 // pred_check_branch
      %53 = sbr.rel (0) target = $region21
    $region20: #{tpu_custom_call.1} parent=1 // pred_region
      _
    $region21: #{tpu_custom_call.1} parent=1 // pred_fallthru
      _
    // Predicated region
    $region22: #{tpu_custom_call.1} parent=1 // pred_check
      _
    $region23: #{tpu_custom_call.1} parent=1 // pred_check_branch
      %55 = sbr.rel (0) target = $region25
    $region24: #{tpu_custom_call.1} parent=1 // pred_region
      %s57 = ssub.s32 1024, 1024
      %58 = vsyncadd [#allocation9], %s57
      %s59 = sshll.u32 [#allocation8], 4
      %s60 = int_to_ptr.vmem [resolvable:$true] %s59
      %65 = dma.hbm_to_vmem [thread:$0]  %s5, 1024, %s60, [#allocation9], 64, 64, 4
    $region25: #{tpu_custom_call.1} parent=1 // pred_fallthru
      _
    // Predicated region
    $region26: #{tpu_custom_call.1} parent=1 // pred_check
      _
    $region27: #{tpu_custom_call.1} parent=1 // pred_check_branch
      %67 = sbr.rel (0) target = $region29
    $region28: #{tpu_custom_call.1} parent=1 // pred_region
      _
    $region29: #{tpu_custom_call.1} parent=1 // pred_fallthru
      _
    // Predicated region
    $region30: #{tpu_custom_call.1} parent=1 // pred_check
      _
    $region31: #{tpu_custom_call.1} parent=1 // pred_check_branch
      %69 = sbr.rel (0) target = $region33
    $region32: #{tpu_custom_call.1} parent=1 // pred_region
      %70 = dma.done [#allocation3], 896
    $region33: #{tpu_custom_call.1} parent=1 // pred_fallthru
      _
    // Predicated region
    $region34: #{tpu_custom_call.1} parent=1 // pred_check
      _
    $region35: #{tpu_custom_call.1} parent=1 // pred_check_branch
      %72 = sbr.rel (0) target = $region37
    $region36: #{tpu_custom_call.1} parent=1 // pred_region
      %73 = dma.done [#allocation6], 6272
    $region37: #{tpu_custom_call.1} parent=1 // pred_fallthru
      _
    // Predicated region
    $region38: #{tpu_custom_call.1} parent=1 // pred_check
      _
    $region39: #{tpu_custom_call.1} parent=1 // pred_check_branch
      %75 = sbr.rel (0) target = $region41
    $region40: #{tpu_custom_call.1} parent=1 // pred_region
      %76 = dma.done [#allocation6], 1024
    $region41: #{tpu_custom_call.1} parent=1 // pred_fallthru
      _
    // Predicated region
    $region42: #{tpu_custom_call.1} parent=1 // pred_check
      _
    $region43: #{tpu_custom_call.1} parent=1 // pred_check_branch
      %78 = sbr.rel (0) target = $region45
    $region44: #{tpu_custom_call.1} parent=1 // pred_region
      %79 = dma.done [#allocation9], 1024
    $region45: #{tpu_custom_call.1} parent=1 // pred_fallthru
      _
    %v81 = vld [vmem:[#allocation2] sm:$0xff]
    %v82 = vld [vmem:[#allocation2 + $0x8] sm:$0xff]
    %v83 = vld [vmem:[#allocation2 + $0x10] sm:$0xff]
    %v84 = vld [vmem:[#allocation2 + $0x18] sm:$0xff]
    %v85 = vld [vmem:[#allocation2 + $0x20] sm:$0xff]
    %v86 = vld [vmem:[#allocation2 + $0x28] sm:$0xff]
    %v87 = vld [vmem:[#allocation2 + $0x30] sm:$0xff]
    %v88 = vmul.f32 %v81, %v81
    %v89 = vmul.f32 %v82, %v82
    %v90 = vmul.f32 %v83, %v83
    %v91 = vmul.f32 %v84, %v84
    %v92 = vmul.f32 %v85, %v85
    %v93 = vmul.f32 %v86, %v86
    %v94 = vmul.f32 %v87, %v87
    %v95 = vadd.f32 %v88, %v89
    %v96 = vadd.f32 %v95, %v90
    %v97 = vadd.f32 %v96, %v91
    %v98 = vadd.f32 %v97, %v92
    %v99 = vadd.f32 %v98, %v93
    %vm100 = vcmask 130048
    %v101 = vsel %vm100, %v94, 0.0
    %v102 = vadd.f32 %v99, %v101
    %103 = vadd.xlane.f32.xlu0 %v102
    %v104 = vpop.xlane.xlu0 %103
    %v105 = vrsqrt.pop %v104
    %v106 = vmul.f32 %v104, %v105
    %vm107 = vcmp.eq.f32.partialorder %v104, inf
    %v108 = vsel %vm107, %v104, %v106
    %vm109 = vcmp.eq.f32.partialorder %v104, 0.0
    %v110 = vand.u32 %v104, 2147483648
    %v111 = vsel %vm109, %v110, %v108
    %v112 = vadd.f32 %v111, 0.0001
    %v113 = vrcp.pop %v112
    %v114 = vmul.f32 %v81, %v113
    %v115 = vmul.f32 %v82, %v113
    %v116 = vmul.f32 %v83, %v113
    %v117 = vmul.f32 %v84, %v113
    %v118 = vmul.f32 %v85, %v113
    %v119 = vmul.f32 %v86, %v113
    %v120 = vmul.f32 %v87, %v113
    %v121 = vpack.c.bf16 %v114, %v114
    %v122 = vpack.c.bf16 %v115, %v115
    %v123 = vpack.c.bf16 %v116, %v116
    %v124 = vpack.c.bf16 %v117, %v117
    %v125 = vpack.c.bf16 %v118, %v118
    %v126 = vpack.c.bf16 %v119, %v119
    %v127 = vpack.c.bf16 %v120, %v120
    %v128 = vld [vmem:[#allocation5] sm:$0xf]
    %v129 = vld [vmem:[#allocation5 + $0x4] sm:$0xf]
    %v130 = vld [vmem:[#allocation5 + $0x8] sm:$0xf]
    %v131 = vld [vmem:[#allocation5 + $0xc] sm:$0xf]
    %v132 = vld [vmem:[#allocation5 + $0x10] sm:$0xf]
    %v133 = vld [vmem:[#allocation5 + $0x14] sm:$0xf]
    %v134 = vld [vmem:[#allocation5 + $0x18] sm:$0xf]
    %v135 = vld [vmem:[#allocation5 + $0x1c] sm:$0xf]
    %v136 = vld [vmem:[#allocation5 + $0x20] sm:$0xf]
    %v137 = vld [vmem:[#allocation5 + $0x24] sm:$0xf]
    %v138 = vld [vmem:[#allocation5 + $0x28] sm:$0xf]
    %v139 = vld [vmem:[#allocation5 + $0x2c] sm:$0xf]
    %v140 = vld [vmem:[#allocation5 + $0x30] sm:$0xf]
    %v141 = vld [vmem:[#allocation5 + $0x34] sm:$0xf]
    %v142 = vld [vmem:[#allocation5 + $0x38] sm:$0xf]
    %v143 = vld [vmem:[#allocation5 + $0x3c] sm:$0xf]
    %v144 = vld [vmem:[#allocation5 + $0x40] sm:$0xf]
    %v145 = vld [vmem:[#allocation5 + $0x44] sm:$0xf]
    %v146 = vld [vmem:[#allocation5 + $0x48] sm:$0xf]
    %v147 = vld [vmem:[#allocation5 + $0x4c] sm:$0xf]
    %v148 = vld [vmem:[#allocation5 + $0x50] sm:$0xf]
    %v149 = vld [vmem:[#allocation5 + $0x54] sm:$0xf]
    %v150 = vld [vmem:[#allocation5 + $0x58] sm:$0xf]
    %v151 = vld [vmem:[#allocation5 + $0x5c] sm:$0xf]
    %v152 = vld [vmem:[#allocation5 + $0x60] sm:$0xf]
    %v153 = vld [vmem:[#allocation5 + $0x64] sm:$0xf]
    %v154 = vld [vmem:[#allocation5 + $0x68] sm:$0xf]
    %v155 = vld [vmem:[#allocation5 + $0x6c] sm:$0xf]
    %v156 = vld [vmem:[#allocation5 + $0x70] sm:$0xf]
    %v157 = vld [vmem:[#allocation5 + $0x74] sm:$0xf]
    %v158 = vld [vmem:[#allocation5 + $0x78] sm:$0xf]
    %v159 = vld [vmem:[#allocation5 + $0x7c] sm:$0xf]
    %v160 = vld [vmem:[#allocation5 + $0x80] sm:$0xf]
    %v161 = vld [vmem:[#allocation5 + $0x84] sm:$0xf]
    %v162 = vld [vmem:[#allocation5 + $0x88] sm:$0xf]
    %v163 = vld [vmem:[#allocation5 + $0x8c] sm:$0xf]
    %v164 = vld [vmem:[#allocation5 + $0x90] sm:$0xf]
    %v165 = vld [vmem:[#allocation5 + $0x94] sm:$0xf]
    %v166 = vld [vmem:[#allocation5 + $0x98] sm:$0xf]
    %v167 = vld [vmem:[#allocation5 + $0x9c] sm:$0xf]
    %v168 = vld [vmem:[#allocation5 + $0xa0] sm:$0xf]
    %v169 = vld [vmem:[#allocation5 + $0xa4] sm:$0xf]
    %v170 = vld [vmem:[#allocation5 + $0xa8] sm:$0xf]
    %v171 = vld [vmem:[#allocation5 + $0xac] sm:$0xf]
    %v172 = vld [vmem:[#allocation5 + $0xb0] sm:$0xf]
    %v173 = vld [vmem:[#allocation5 + $0xb4] sm:$0xf]
    %v174 = vld [vmem:[#allocation5 + $0xb8] sm:$0xf]
    %v175 = vld [vmem:[#allocation5 + $0xbc] sm:$0xf]
    %v176 = vld [vmem:[#allocation5 + $0xc0] sm:$0xf]
    %v177 = vld [vmem:[#allocation5 + $0xc4] sm:$0xf]
    %v178 = vld [vmem:[#allocation5 + $0xc8] sm:$0xf]
    %v179 = vld [vmem:[#allocation5 + $0xcc] sm:$0xf]
    %v180 = vld [vmem:[#allocation5 + $0xd0] sm:$0xf]
    %v181 = vld [vmem:[#allocation5 + $0xd4] sm:$0xf]
    %v182 = vld [vmem:[#allocation5 + $0xd8] sm:$0xf]
    %v183 = vld [vmem:[#allocation5 + $0xdc] sm:$0xf]
    %v184 = vld [vmem:[#allocation5 + $0xe0] sm:$0xf]
    %v185 = vld [vmem:[#allocation5 + $0xe4] sm:$0xf]
    %v186 = vld [vmem:[#allocation5 + $0xe8] sm:$0xf]
    %v187 = vld [vmem:[#allocation5 + $0xec] sm:$0xf]
    %v188 = vld [vmem:[#allocation5 + $0xf0] sm:$0xf]
    %v189 = vld [vmem:[#allocation5 + $0xf4] sm:$0xf]
    %v190 = vld [vmem:[#allocation5 + $0xf8] sm:$0xf]
    %v191 = vld [vmem:[#allocation5 + $0xfc] sm:$0xf]
    %v192 = vld [vmem:[#allocation5 + $0x100] sm:$0xf]
    %v193 = vld [vmem:[#allocation5 + $0x104] sm:$0xf]
    %v194 = vld [vmem:[#allocation5 + $0x108] sm:$0xf]
    %v195 = vld [vmem:[#allocation5 + $0x10c] sm:$0xf]
    %v196 = vld [vmem:[#allocation5 + $0x110] sm:$0xf]
    %v197 = vld [vmem:[#allocation5 + $0x114] sm:$0xf]
    %v198 = vld [vmem:[#allocation5 + $0x118] sm:$0xf]
    %v199 = vld [vmem:[#allocation5 + $0x11c] sm:$0xf]
    %v200 = vld [vmem:[#allocation5 + $0x120] sm:$0xf]
    %v201 = vld [vmem:[#allocation5 + $0x124] sm:$0xf]
    %v202 = vld [vmem:[#allocation5 + $0x128] sm:$0xf]
    %v203 = vld [vmem:[#allocation5 + $0x12c] sm:$0xf]
    %v204 = vld [vmem:[#allocation5 + $0x130] sm:$0xf]
    %v205 = vld [vmem:[#allocation5 + $0x134] sm:$0xf]
    %v206 = vld [vmem:[#allocation5 + $0x138] sm:$0xf]
    %v207 = vld [vmem:[#allocation5 + $0x13c] sm:$0xf]
    %v208 = vld [vmem:[#allocation5 + $0x140] sm:$0xf]
    %v209 = vld [vmem:[#allocation5 + $0x144] sm:$0xf]
    %v210 = vld [vmem:[#allocation5 + $0x148] sm:$0xf]
    %v211 = vld [vmem:[#allocation5 + $0x14c] sm:$0xf]
    %v212 = vld [vmem:[#allocation5 + $0x150] sm:$0xf]
    %v213 = vld [vmem:[#allocation5 + $0x154] sm:$0xf]
    %v214 = vld [vmem:[#allocation5 + $0x158] sm:$0xf]
    %v215 = vld [vmem:[#allocation5 + $0x15c] sm:$0xf]
    %v216 = vld [vmem:[#allocation5 + $0x160] sm:$0xf]
    %v217 = vld [vmem:[#allocation5 + $0x164] sm:$0xf]
    %v218 = vld [vmem:[#allocation5 + $0x168] sm:$0xf]
    %v219 = vld [vmem:[#allocation5 + $0x16c] sm:$0xf]
    %v220 = vld [vmem:[#allocation5 + $0x170] sm:$0xf]
    %v221 = vld [vmem:[#allocation5 + $0x174] sm:$0xf]
    %v222 = vld [vmem:[#allocation5 + $0x178] sm:$0xf]
    %v223 = vld [vmem:[#allocation5 + $0x17c] sm:$0xf]
    %v224 = vld [vmem:[#allocation5 + $0x180] sm:$0xf]
    %v225 = vld [vmem:[#allocation5 + $0x184] sm:$0xf]
    %v226 = vld [vmem:[%s2] sm:$0x1]
    %v228 = vlaneseq
    %v229 = vshrl.u32 %v228, 7
    %v230 = vsub.s32 0, %v229
    %v231 = vrot.slane %v226, %v230
    %v331 = vunpack.c.l.b16 %v128
    %v332 = vunpack.c.l.b16 %v129
    %v333 = vunpack.c.l.b16 %v130
    %v334 = vunpack.c.l.b16 %v131
    %v335 = vunpack.c.l.b16 %v132
    %v336 = vunpack.c.l.b16 %v133
    %v337 = vunpack.c.l.b16 %v134
    %v338 = vunpack.c.l.b16 %v135
    %v339 = vunpack.c.l.b16 %v136
    %v340 = vunpack.c.l.b16 %v137
    %v341 = vunpack.c.l.b16 %v138
    %v342 = vunpack.c.l.b16 %v139
    %v343 = vunpack.c.l.b16 %v140
    %v344 = vunpack.c.l.b16 %v141
    %v345 = vunpack.c.l.b16 %v142
    %v346 = vunpack.c.l.b16 %v143
    %v347 = vunpack.c.l.b16 %v144
    %v348 = vunpack.c.l.b16 %v145
    %v349 = vunpack.c.l.b16 %v146
    %v350 = vunpack.c.l.b16 %v147
    %v351 = vunpack.c.l.b16 %v148
    %v352 = vunpack.c.l.b16 %v149
    %v353 = vunpack.c.l.b16 %v150
    %v354 = vunpack.c.l.b16 %v151
    %v355 = vunpack.c.l.b16 %v152
    %v356 = vunpack.c.l.b16 %v153
    %v357 = vunpack.c.l.b16 %v154
    %v358 = vunpack.c.l.b16 %v155
    %v359 = vunpack.c.l.b16 %v156
    %v360 = vunpack.c.l.b16 %v157
    %v361 = vunpack.c.l.b16 %v158
    %v362 = vunpack.c.l.b16 %v159
    %v363 = vunpack.c.l.b16 %v160
    %v364 = vunpack.c.l.b16 %v161
    %v365 = vunpack.c.l.b16 %v162
    %v366 = vunpack.c.l.b16 %v163
    %v367 = vunpack.c.l.b16 %v164
    %v368 = vunpack.c.l.b16 %v165
    %v369 = vunpack.c.l.b16 %v166
    %v370 = vunpack.c.l.b16 %v167
    %v371 = vunpack.c.l.b16 %v168
    %v372 = vunpack.c.l.b16 %v169
    %v373 = vunpack.c.l.b16 %v170
    %v374 = vunpack.c.l.b16 %v171
    %v375 = vunpack.c.l.b16 %v172
    %v376 = vunpack.c.l.b16 %v173
    %v377 = vunpack.c.l.b16 %v174
    %v378 = vunpack.c.l.b16 %v175
    %v379 = vunpack.c.l.b16 %v176
    %v380 = vunpack.c.l.b16 %v177
    %v381 = vunpack.c.l.b16 %v178
    %v382 = vunpack.c.l.b16 %v179
    %v383 = vunpack.c.l.b16 %v180
    %v384 = vunpack.c.l.b16 %v181
    %v385 = vunpack.c.l.b16 %v182
    %v386 = vunpack.c.l.b16 %v183
    %v387 = vunpack.c.l.b16 %v184
    %v388 = vunpack.c.l.b16 %v185
    %v389 = vunpack.c.l.b16 %v186
    %v390 = vunpack.c.l.b16 %v187
    %v391 = vunpack.c.l.b16 %v188
    %v392 = vunpack.c.l.b16 %v189
    %v393 = vunpack.c.l.b16 %v190
    %v394 = vunpack.c.l.b16 %v191
    %v395 = vunpack.c.l.b16 %v192
    %v396 = vunpack.c.l.b16 %v193
    %v397 = vunpack.c.l.b16 %v194
    %v398 = vunpack.c.l.b16 %v195
    %v399 = vunpack.c.l.b16 %v196
    %v400 = vunpack.c.l.b16 %v197
    %v401 = vunpack.c.l.b16 %v198
    %v402 = vunpack.c.l.b16 %v199
    %v403 = vunpack.c.l.b16 %v200
    %v404 = vunpack.c.l.b16 %v201
    %v405 = vunpack.c.l.b16 %v202
    %v406 = vunpack.c.l.b16 %v203
    %v407 = vunpack.c.l.b16 %v204
    %v408 = vunpack.c.l.b16 %v205
    %v409 = vunpack.c.l.b16 %v206
    %v410 = vunpack.c.l.b16 %v207
    %v411 = vunpack.c.l.b16 %v208
    %v412 = vunpack.c.l.b16 %v209
    %v413 = vunpack.c.l.b16 %v210
    %v414 = vunpack.c.l.b16 %v211
    %v415 = vunpack.c.l.b16 %v212
    %v416 = vunpack.c.l.b16 %v213
    %v417 = vunpack.c.l.b16 %v214
    %v418 = vunpack.c.l.b16 %v215
    %v419 = vunpack.c.l.b16 %v216
    %v420 = vunpack.c.l.b16 %v217
    %v421 = vunpack.c.l.b16 %v218
    %v422 = vunpack.c.l.b16 %v219
    %v423 = vunpack.c.l.b16 %v220
    %v424 = vunpack.c.l.b16 %v221
    %v425 = vunpack.c.l.b16 %v222
    %v426 = vunpack.c.l.b16 %v223
    %v427 = vunpack.c.l.b16 %v224
    %v428 = vunpack.c.l.b16 %v225
    %v429 = vpack.c.b16 %v332, %v331
    %v430 = vpack.c.b16 %v334, %v333
    %v431 = vpack.c.b16 %v336, %v335
    %v432 = vpack.c.b16 %v338, %v337
    %v433 = vpack.c.b16 %v340, %v339
    %v434 = vpack.c.b16 %v342, %v341
    %v435 = vpack.c.b16 %v344, %v343
    %v436 = vpack.c.b16 %v346, %v345
    %v437 = vpack.c.b16 %v348, %v347
    %v438 = vpack.c.b16 %v350, %v349
    %v439 = vpack.c.b16 %v352, %v351
    %v440 = vpack.c.b16 %v354, %v353
    %v441 = vpack.c.b16 %v356, %v355
    %v442 = vpack.c.b16 %v358, %v357
    %v443 = vpack.c.b16 %v360, %v359
    %v444 = vpack.c.b16 %v362, %v361
    %v445 = vpack.c.b16 %v364, %v363
    %v446 = vpack.c.b16 %v366, %v365
    %v447 = vpack.c.b16 %v368, %v367
    %v448 = vpack.c.b16 %v370, %v369
    %v449 = vpack.c.b16 %v372, %v371
    %v450 = vpack.c.b16 %v374, %v373
    %v451 = vpack.c.b16 %v376, %v375
    %v452 = vpack.c.b16 %v378, %v377
    %v453 = vpack.c.b16 %v380, %v379
    %v454 = vpack.c.b16 %v382, %v381
    %v455 = vpack.c.b16 %v384, %v383
    %v456 = vpack.c.b16 %v386, %v385
    %v457 = vpack.c.b16 %v388, %v387
    %v458 = vpack.c.b16 %v390, %v389
    %v459 = vpack.c.b16 %v392, %v391
    %v460 = vpack.c.b16 %v394, %v393
    %v461 = vpack.c.b16 %v396, %v395
    %v462 = vpack.c.b16 %v398, %v397
    %v463 = vpack.c.b16 %v400, %v399
    %v464 = vpack.c.b16 %v402, %v401
    %v465 = vpack.c.b16 %v404, %v403
    %v466 = vpack.c.b16 %v406, %v405
    %v467 = vpack.c.b16 %v408, %v407
    %v468 = vpack.c.b16 %v410, %v409
    %v469 = vpack.c.b16 %v412, %v411
    %v470 = vpack.c.b16 %v414, %v413
    %v471 = vpack.c.b16 %v416, %v415
    %v472 = vpack.c.b16 %v418, %v417
    %v473 = vpack.c.b16 %v420, %v419
    %v474 = vpack.c.b16 %v422, %v421
    %v475 = vpack.c.b16 %v424, %v423
    %v476 = vpack.c.b16 %v426, %v425
    %v477 = vpack.c.b16 %v428, %v427
    %v528 = vsel %vm100, %v127, 0
    %530 = vmatprep.subr.bf16.mxu0 0
    %531 = vmatpush1.bf16.msra.mxu0 %v429
    %532 = vmatprep.subr.bf16.mxu0 0
    %533 = vmatpush1.bf16.msra.mxu0 %v430
    %534 = vmatprep.subr.bf16.mxu0 0
    %535 = vmatpush1.bf16.msra.mxu0 %v431
    %536 = vmatprep.subr.bf16.mxu0 0
    %537 = vmatpush1.bf16.msra.mxu0 %v432
    %538 = vmatprep.subr.bf16.mxu0 0
    %539 = vmatpush1.bf16.msra.mxu0 %v433
    %540 = vmatprep.subr.bf16.mxu0 0
    %541 = vmatpush1.bf16.msra.mxu0 %v434
    %542 = vmatprep.subr.bf16.mxu0 0
    %543 = vmatpush1.bf16.msra.mxu0 %v435
    %544 = vmatprep.subr.bf16.mxu0 0
    %545 = vmatpush1.bf16.msra.mxu0 %v436
    %546 = vmatprep.subr.bf16.mxu0 0
    %547 = vmatpush1.bf16.msra.mxu0 %v437
    %548 = vmatprep.subr.bf16.mxu0 0
    %549 = vmatpush1.bf16.msra.mxu0 %v438
    %550 = vmatprep.subr.bf16.mxu0 0
    %551 = vmatpush1.bf16.msra.mxu0 %v439
    %552 = vmatprep.subr.bf16.mxu0 0
    %553 = vmatpush1.bf16.msra.mxu0 %v440
    %554 = vmatprep.subr.bf16.mxu0 0
    %555 = vmatpush1.bf16.msra.mxu0 %v441
    %556 = vmatprep.subr.bf16.mxu0 0
    %557 = vmatpush1.bf16.msra.mxu0 %v442
    %558 = vmatprep.subr.bf16.mxu0 0
    %559 = vmatpush1.bf16.msra.mxu0 %v443
    %560 = vmatprep.subr.bf16.mxu0 0
    %561 = vmatpush1.bf16.msra.mxu0 %v444
    %562 = vmatprep.mubr.bf16.mxu0 %v122
    %563 = vmatmul.mubr.bf16.gmra.mrb[0].mxu0 %v121
    %v564 = vpop.f32.mrb[0].mxu0
    %v565 = vadd.f32 %v231, %v564
    %v566 = vpop.f32.mrb[0].mxu0
    %v567 = vpop.f32.mrb[0].mxu0
    %v568 = vpop.f32.mrb[0].mxu0
    %569 = vdwg.mxu0
    %570 = vmatprep.subr.bf16.mxu0 0
    %571 = vmatpush1.bf16.msra.mxu0 %v445
    %572 = vmatprep.subr.bf16.mxu0 0
    %573 = vmatpush1.bf16.msra.mxu0 %v446
    %574 = vmatprep.subr.bf16.mxu0 0
    %575 = vmatpush1.bf16.msra.mxu0 %v447
    %576 = vmatprep.subr.bf16.mxu0 0
    %577 = vmatpush1.bf16.msra.mxu0 %v448
    %578 = vmatprep.subr.bf16.mxu0 0
    %579 = vmatpush1.bf16.msra.mxu0 %v449
    %580 = vmatprep.subr.bf16.mxu0 0
    %581 = vmatpush1.bf16.msra.mxu0 %v450
    %582 = vmatprep.subr.bf16.mxu0 0
    %583 = vmatpush1.bf16.msra.mxu0 %v451
    %584 = vmatprep.subr.bf16.mxu0 0
    %585 = vmatpush1.bf16.msra.mxu0 %v452
    %586 = vmatprep.subr.bf16.mxu0 0
    %587 = vmatpush1.bf16.msra.mxu0 %v453
    %588 = vmatprep.subr.bf16.mxu0 0
    %589 = vmatpush1.bf16.msra.mxu0 %v454
    %590 = vmatprep.subr.bf16.mxu0 0
    %591 = vmatpush1.bf16.msra.mxu0 %v455
    %592 = vmatprep.subr.bf16.mxu0 0
    %593 = vmatpush1.bf16.msra.mxu0 %v456
    %594 = vmatprep.subr.bf16.mxu0 0
    %595 = vmatpush1.bf16.msra.mxu0 %v457
    %596 = vmatprep.subr.bf16.mxu0 0
    %597 = vmatpush1.bf16.msra.mxu0 %v458
    %598 = vmatprep.subr.bf16.mxu0 0
    %599 = vmatpush1.bf16.msra.mxu0 %v459
    %600 = vmatprep.subr.bf16.mxu0 0
    %601 = vmatpush1.bf16.msra.mxu0 %v460
    %602 = vmatprep.mubr.bf16.mxu0 %v124
    %603 = vmatmul.mubr.bf16.gmra.mrb[0].mxu0 %v123
    %v604 = vpop.f32.mrb[0].mxu0
    %v605 = vadd.f32 %v565, %v604
    %v606 = vpop.f32.mrb[0].mxu0
    %v607 = vpop.f32.mrb[0].mxu0
    %v608 = vpop.f32.mrb[0].mxu0
    %609 = vdwg.mxu0
    %610 = vmatprep.subr.bf16.mxu0 0
    %611 = vmatpush1.bf16.msra.mxu0 %v461
    %612 = vmatprep.subr.bf16.mxu0 0
    %613 = vmatpush1.bf16.msra.mxu0 %v462
    %614 = vmatprep.subr.bf16.mxu0 0
    %615 = vmatpush1.bf16.msra.mxu0 %v463
    %616 = vmatprep.subr.bf16.mxu0 0
    %617 = vmatpush1.bf16.msra.mxu0 %v464
    %618 = vmatprep.subr.bf16.mxu0 0
    %619 = vmatpush1.bf16.msra.mxu0 %v465
    %620 = vmatprep.subr.bf16.mxu0 0
    %621 = vmatpush1.bf16.msra.mxu0 %v466
    %622 = vmatprep.subr.bf16.mxu0 0
    %623 = vmatpush1.bf16.msra.mxu0 %v467
    %624 = vmatprep.subr.bf16.mxu0 0
    %625 = vmatpush1.bf16.msra.mxu0 %v468
    %626 = vmatprep.subr.bf16.mxu0 0
    %627 = vmatpush1.bf16.msra.mxu0 %v469
    %628 = vmatprep.subr.bf16.mxu0 0
    %629 = vmatpush1.bf16.msra.mxu0 %v470
    %630 = vmatprep.subr.bf16.mxu0 0
    %631 = vmatpush1.bf16.msra.mxu0 %v471
    %632 = vmatprep.subr.bf16.mxu0 0
    %633 = vmatpush1.bf16.msra.mxu0 %v472
    %634 = vmatprep.subr.bf16.mxu0 0
    %635 = vmatpush1.bf16.msra.mxu0 %v473
    %636 = vmatprep.subr.bf16.mxu0 0
    %637 = vmatpush1.bf16.msra.mxu0 %v474
    %638 = vmatprep.subr.bf16.mxu0 0
    %639 = vmatpush1.bf16.msra.mxu0 %v475
    %640 = vmatprep.subr.bf16.mxu0 0
    %641 = vmatpush1.bf16.msra.mxu0 %v476
    %642 = vmatprep.mubr.bf16.mxu0 %v126
    %643 = vmatmul.mubr.bf16.gmra.mrb[0].mxu0 %v125
    %v644 = vpop.f32.mrb[0].mxu0
    %v645 = vadd.f32 %v605, %v644
    %v646 = vpop.f32.mrb[0].mxu0
    %v647 = vpop.f32.mrb[0].mxu0
    %v648 = vpop.f32.mrb[0].mxu0
    %649 = vdwg.mxu0
    %650 = vmatprep.subr.bf16.mxu0 0
    %651 = vmatpush1.bf16.msra.mxu0 %v477
    %652 = vmatprep.subr.bf16.mxu0 0
    %653 = vmatpush1.bf16.msra.mxu0 0
    %654 = vmatprep.subr.bf16.mxu0 0
    %655 = vmatpush1.bf16.msra.mxu0 0
    %656 = vmatprep.subr.bf16.mxu0 0
    %657 = vmatpush1.bf16.msra.mxu0 0
    %658 = vmatprep.subr.bf16.mxu0 0
    %659 = vmatpush1.bf16.msra.mxu0 0
    %660 = vmatprep.subr.bf16.mxu0 0
    %661 = vmatpush1.bf16.msra.mxu0 0
    %662 = vmatprep.subr.bf16.mxu0 0
    %663 = vmatpush1.bf16.msra.mxu0 0
    %664 = vmatprep.subr.bf16.mxu0 0
    %665 = vmatpush1.bf16.msra.mxu0 0
    %666 = vmatprep.subr.bf16.mxu0 0
    %667 = vmatpush1.bf16.msra.mxu0 0
    %668 = vmatprep.subr.bf16.mxu0 0
    %669 = vmatpush1.bf16.msra.mxu0 0
    %670 = vmatprep.subr.bf16.mxu0 0
    %671 = vmatpush1.bf16.msra.mxu0 0
    %672 = vmatprep.subr.bf16.mxu0 0
    %673 = vmatpush1.bf16.msra.mxu0 0
    %674 = vmatprep.subr.bf16.mxu0 0
    %675 = vmatpush1.bf16.msra.mxu0 0
    %676 = vmatprep.subr.bf16.mxu0 0
    %677 = vmatpush1.bf16.msra.mxu0 0
    %678 = vmatprep.subr.bf16.mxu0 0
    %679 = vmatpush1.bf16.msra.mxu0 0
    %680 = vmatprep.subr.bf16.mxu0 0
    %681 = vmatpush1.bf16.msra.mxu0 0
    %682 = vmatprep.mubr.bf16.mxu0 0
    %683 = vmatmul.mubr.bf16.gmra.mrb[0].mxu0 %v528
    %v684 = vpop.f32.mrb[0].mxu0
    %v685 = vadd.f32 %v645, %v684
    %v686 = vpop.f32.mrb[0].mxu0
    %v687 = vpop.f32.mrb[0].mxu0
    %v688 = vpop.f32.mrb[0].mxu0
    %689 = vdwg.mxu0
    %v690 = vmax.f32 %v685, 0.0
    %v691 = vmul.f32 %v690, %v690
    %692 = vadd.xlane.f32.xlu0 %v691
    %v693 = vpop.xlane.xlu0 %692
    %v694 = vrsqrt.pop %v693
    %v695 = vmul.f32 %v693, %v694
    %vm696 = vcmp.eq.f32.partialorder %v693, inf
    %v697 = vsel %vm696, %v693, %v695
    %vm698 = vcmp.eq.f32.partialorder %v693, 0.0
    %v699 = vand.u32 %v693, 2147483648
    %v700 = vsel %vm698, %v699, %v697
    %v701 = vadd.f32 %v700, 0.0001
    %v702 = vrcp.pop %v701
    %v703 = vmul.f32 %v690, %v702
    %v704 = vpack.c.bf16 %v703, %v703
    %v705 = vld [vmem:[#allocation7] sm:$0xf]
    %v706 = vld [vmem:[#allocation7 + $0x4] sm:$0xf]
    %v707 = vld [vmem:[#allocation7 + $0x8] sm:$0xf]
    %v708 = vld [vmem:[#allocation7 + $0xc] sm:$0xf]
    %v709 = vld [vmem:[#allocation7 + $0x10] sm:$0xf]
    %v710 = vld [vmem:[#allocation7 + $0x14] sm:$0xf]
    %v711 = vld [vmem:[#allocation7 + $0x18] sm:$0xf]
    %v712 = vld [vmem:[#allocation7 + $0x1c] sm:$0xf]
    %v713 = vld [vmem:[#allocation7 + $0x20] sm:$0xf]
    %v714 = vld [vmem:[#allocation7 + $0x24] sm:$0xf]
    %v715 = vld [vmem:[#allocation7 + $0x28] sm:$0xf]
    %v716 = vld [vmem:[#allocation7 + $0x2c] sm:$0xf]
    %v717 = vld [vmem:[#allocation7 + $0x30] sm:$0xf]
    %v718 = vld [vmem:[#allocation7 + $0x34] sm:$0xf]
    %v719 = vld [vmem:[#allocation7 + $0x38] sm:$0xf]
    %v720 = vld [vmem:[#allocation7 + $0x3c] sm:$0xf]
    %v721 = vld [vmem:[%s4] sm:$0x1]
    %v723 = vlaneseq
    %v724 = vshrl.u32 %v723, 7
    %v725 = vsub.s32 0, %v724
    %v726 = vrot.slane %v721, %v725
    %v744 = vunpack.c.l.b16 %v705
    %v745 = vunpack.c.l.b16 %v706
    %v746 = vunpack.c.l.b16 %v707
    %v747 = vunpack.c.l.b16 %v708
    %v748 = vunpack.c.l.b16 %v709
    %v749 = vunpack.c.l.b16 %v710
    %v750 = vunpack.c.l.b16 %v711
    %v751 = vunpack.c.l.b16 %v712
    %v752 = vunpack.c.l.b16 %v713
    %v753 = vunpack.c.l.b16 %v714
    %v754 = vunpack.c.l.b16 %v715
    %v755 = vunpack.c.l.b16 %v716
    %v756 = vunpack.c.l.b16 %v717
    %v757 = vunpack.c.l.b16 %v718
    %v758 = vunpack.c.l.b16 %v719
    %v759 = vunpack.c.l.b16 %v720
    %v760 = vpack.c.b16 %v745, %v744
    %v761 = vpack.c.b16 %v747, %v746
    %v762 = vpack.c.b16 %v749, %v748
    %v763 = vpack.c.b16 %v751, %v750
    %v764 = vpack.c.b16 %v753, %v752
    %v765 = vpack.c.b16 %v755, %v754
    %v766 = vpack.c.b16 %v757, %v756
    %v767 = vpack.c.b16 %v759, %v758
    %776 = vmatprep.subr.bf16.mxu0 0
    %777 = vmatpush1.bf16.msra.mxu0 %v760
    %778 = vmatprep.subr.bf16.mxu0 0
    %779 = vmatpush1.bf16.msra.mxu0 %v761
    %780 = vmatprep.subr.bf16.mxu0 0
    %781 = vmatpush1.bf16.msra.mxu0 %v762
    %782 = vmatprep.subr.bf16.mxu0 0
    %783 = vmatpush1.bf16.msra.mxu0 %v763
    %784 = vmatprep.subr.bf16.mxu0 0
    %785 = vmatpush1.bf16.msra.mxu0 %v764
    %786 = vmatprep.subr.bf16.mxu0 0
    %787 = vmatpush1.bf16.msra.mxu0 %v765
    %788 = vmatprep.subr.bf16.mxu0 0
    %789 = vmatpush1.bf16.msra.mxu0 %v766
    %790 = vmatprep.subr.bf16.mxu0 0
    %791 = vmatpush1.bf16.msra.mxu0 %v767
    %792 = vmatprep.subr.bf16.mxu0 0
    %793 = vmatpush1.bf16.msra.mxu0 0
    %794 = vmatprep.subr.bf16.mxu0 0
    %795 = vmatpush1.bf16.msra.mxu0 0
    %796 = vmatprep.subr.bf16.mxu0 0
    %797 = vmatpush1.bf16.msra.mxu0 0
    %798 = vmatprep.subr.bf16.mxu0 0
    %799 = vmatpush1.bf16.msra.mxu0 0
    %800 = vmatprep.subr.bf16.mxu0 0
    %801 = vmatpush1.bf16.msra.mxu0 0
    %802 = vmatprep.subr.bf16.mxu0 0
    %803 = vmatpush1.bf16.msra.mxu0 0
    %804 = vmatprep.subr.bf16.mxu0 0
    %805 = vmatpush1.bf16.msra.mxu0 0
    %806 = vmatprep.subr.bf16.mxu0 0
    %807 = vmatpush1.bf16.msra.mxu0 0
    %808 = vmatprep.mubr.bf16.mxu0 0
    %809 = vmatmul.mubr.bf16.gmra.mrb[0].mxu0 %v704
    %v810 = vpop.f32.mrb[0].mxu0
    %v811 = vadd.f32 %v726, %v810
    %v812 = vpop.f32.mrb[0].mxu0
    %v813 = vpop.f32.mrb[0].mxu0
    %v814 = vpop.f32.mrb[0].mxu0
    %815 = vdwg.mxu0
    %v816 = vmax.f32 %v811, 0.0
    %v817 = vmul.f32 %v816, %v816
    %818 = vadd.xlane.f32.xlu0 %v817
    %v819 = vpop.xlane.xlu0 %818
    %v820 = vrsqrt.pop %v819
    %v821 = vmul.f32 %v819, %v820
    %vm822 = vcmp.eq.f32.partialorder %v819, inf
    %v823 = vsel %vm822, %v819, %v821
    %vm824 = vcmp.eq.f32.partialorder %v819, 0.0
    %v825 = vand.u32 %v819, 2147483648
    %v826 = vsel %vm824, %v825, %v823
    %v827 = vadd.f32 %v826, 0.0001
    %v828 = vrcp.pop %v827
    %v829 = vmul.f32 %v816, %v828
    %v830 = vpack.c.bf16 %v829, %v829
    %v831 = vld [vmem:[#allocation8] sm:$0xf]
    %v832 = vld [vmem:[#allocation8 + $0x4] sm:$0xf]
    %v833 = vld [vmem:[#allocation8 + $0x8] sm:$0xf]
    %v834 = vld [vmem:[#allocation8 + $0xc] sm:$0xf]
    %v835 = vld [vmem:[#allocation8 + $0x10] sm:$0xf]
    %v836 = vld [vmem:[#allocation8 + $0x14] sm:$0xf]
    %v837 = vld [vmem:[#allocation8 + $0x18] sm:$0xf]
    %v838 = vld [vmem:[#allocation8 + $0x1c] sm:$0xf]
    %v839 = vld [vmem:[#allocation8 + $0x20] sm:$0xf]
    %v840 = vld [vmem:[#allocation8 + $0x24] sm:$0xf]
    %v841 = vld [vmem:[#allocation8 + $0x28] sm:$0xf]
    %v842 = vld [vmem:[#allocation8 + $0x2c] sm:$0xf]
    %v843 = vld [vmem:[#allocation8 + $0x30] sm:$0xf]
    %v844 = vld [vmem:[#allocation8 + $0x34] sm:$0xf]
    %v845 = vld [vmem:[#allocation8 + $0x38] sm:$0xf]
    %v846 = vld [vmem:[#allocation8 + $0x3c] sm:$0xf]
    %v847 = vld [vmem:[%s6] sm:$0x1]
    %v849 = vlaneseq
    %v850 = vshrl.u32 %v849, 7
    %v851 = vsub.s32 0, %v850
    %v852 = vrot.slane %v847, %v851
    %v870 = vunpack.c.l.b16 %v831
    %v871 = vunpack.c.l.b16 %v832
    %v872 = vunpack.c.l.b16 %v833
    %v873 = vunpack.c.l.b16 %v834
    %v874 = vunpack.c.l.b16 %v835
    %v875 = vunpack.c.l.b16 %v836
    %v876 = vunpack.c.l.b16 %v837
    %v877 = vunpack.c.l.b16 %v838
    %v878 = vunpack.c.l.b16 %v839
    %v879 = vunpack.c.l.b16 %v840
    %v880 = vunpack.c.l.b16 %v841
    %v881 = vunpack.c.l.b16 %v842
    %v882 = vunpack.c.l.b16 %v843
    %v883 = vunpack.c.l.b16 %v844
    %v884 = vunpack.c.l.b16 %v845
    %v885 = vunpack.c.l.b16 %v846
    %v886 = vpack.c.b16 %v871, %v870
    %v887 = vpack.c.b16 %v873, %v872
    %v888 = vpack.c.b16 %v875, %v874
    %v889 = vpack.c.b16 %v877, %v876
    %v890 = vpack.c.b16 %v879, %v878
    %v891 = vpack.c.b16 %v881, %v880
    %v892 = vpack.c.b16 %v883, %v882
    %v893 = vpack.c.b16 %v885, %v884
    %902 = vmatprep.subr.bf16.mxu0 0
    %903 = vmatpush1.bf16.msra.mxu0 %v886
    %904 = vmatprep.subr.bf16.mxu0 0
    %905 = vmatpush1.bf16.msra.mxu0 %v887
    %906 = vmatprep.subr.bf16.mxu0 0
    %907 = vmatpush1.bf16.msra.mxu0 %v888
    %908 = vmatprep.subr.bf16.mxu0 0
    %909 = vmatpush1.bf16.msra.mxu0 %v889
    %910 = vmatprep.subr.bf16.mxu0 0
    %911 = vmatpush1.bf16.msra.mxu0 %v890
    %912 = vmatprep.subr.bf16.mxu0 0
    %913 = vmatpush1.bf16.msra.mxu0 %v891
    %914 = vmatprep.subr.bf16.mxu0 0
    %915 = vmatpush1.bf16.msra.mxu0 %v892
    %916 = vmatprep.subr.bf16.mxu0 0
    %917 = vmatpush1.bf16.msra.mxu0 %v893
    %918 = vmatprep.subr.bf16.mxu0 0
    %919 = vmatpush1.bf16.msra.mxu0 0
    %920 = vmatprep.subr.bf16.mxu0 0
    %921 = vmatpush1.bf16.msra.mxu0 0
    %922 = vmatprep.subr.bf16.mxu0 0
    %923 = vmatpush1.bf16.msra.mxu0 0
    %924 = vmatprep.subr.bf16.mxu0 0
    %925 = vmatpush1.bf16.msra.mxu0 0
    %926 = vmatprep.subr.bf16.mxu0 0
    %927 = vmatpush1.bf16.msra.mxu0 0
    %928 = vmatprep.subr.bf16.mxu0 0
    %929 = vmatpush1.bf16.msra.mxu0 0
    %930 = vmatprep.subr.bf16.mxu0 0
    %931 = vmatpush1.bf16.msra.mxu0 0
    %932 = vmatprep.subr.bf16.mxu0 0
    %933 = vmatpush1.bf16.msra.mxu0 0
    %934 = vmatprep.mubr.bf16.mxu0 0
    %935 = vmatmul.mubr.bf16.gmra.mrb[0].mxu0 %v830
    %v936 = vpop.f32.mrb[0].mxu0
    %v937 = vadd.f32 %v852, %v936
    %v938 = vpop.f32.mrb[0].mxu0
    %v939 = vpop.f32.mrb[0].mxu0
    %v940 = vpop.f32.mrb[0].mxu0
    %941 = vdwg.mxu0
    %v942 = vmax.f32 %v937, 0.0
    %943 = vst [vmem:[#allocation10] sm:$0xff] %v942
    // Predicated region
    $region46: #{tpu_custom_call.1} parent=1 // pred_check
      _
    $region47: #{tpu_custom_call.1} parent=1 // pred_check_branch
      %945 = sbr.rel (0) target = $region49
    $region48: #{tpu_custom_call.1} parent=1 // pred_region
      %s947 = ssub.s32 128, 128
      %948 = vsyncadd [#allocation4], %s947
      %s950 = sshll.u32 [#allocation10], 4
      %s951 = int_to_ptr.vmem [resolvable:$true] %s950
      %953 = dma.vmem_to_hbm [thread:$0]  %s951, 128, %s7, [#allocation4]
    $region49: #{tpu_custom_call.1} parent=1 // pred_fallthru
      _
    // Predicated region
    $region50: #{tpu_custom_call.1} parent=1 // pred_check
      _
    $region51: #{tpu_custom_call.1} parent=1 // pred_check_branch
      %955 = sbr.rel (0) target = $region53
    $region52: #{tpu_custom_call.1} parent=1 // pred_region
      %956 = dma.done [#allocation4], 128
    $region53: #{tpu_custom_call.1} parent=1 // pred_fallthru
      _
    %957 = vsyncpa [#allocation3], 1
    %958 = vsyncpa [#allocation6], 1
    %959 = vsyncpa [#allocation9], 1
    %960 = vsyncpa [#allocation4], 1

</llo_original>
